<compile_context>
chip_gen: v6e
topology: v6e:2x2x1
jax: 0.10.0
libtpu: 0.0.40
codegen_flags: <defaults>
</compile_context>

<pallas_src>
import jax
import jax.numpy as jnp
from jax import lax
from jax.experimental import pallas as pl
from jax.experimental.pallas import tpu as pltpu


def _self_attention_kernel(wq_ref, wk_ref, wv_ref,
                           bq_ref, bk_ref, bv_ref,
                           xq_ref, xk_ref, xv_ref,
                           out_ref,
                           k_sc, v_sc):
    # Shapes inside the kernel:
    #   wq_ref       : (C, C)      query weight with 1/sqrt(C) folded in
    #   wk/wv_ref    : (C, C)
    #   bq_ref       : (C, 1)      query bias with 1/sqrt(C) folded in
    #   bk/bv_ref    : (C, 1)
    #   xq_ref       : (1, C, Tq)  query tile (also the residual input)
    #   xk/xv_ref    : (1, C, HW)  full key/value inputs for this batch element
    #   out_ref      : (1, C, Tq)
    #   k_sc, v_sc   : (C, HW) bf16 scratch (projected K / V, cached per batch)
    j = pl.program_id(1)

    # Project K and V once per batch element; reused by every q tile of this batch.
    @pl.when(j == 0)
    def _():
        xk = xk_ref[0]
        xv = xv_ref[0]
        k = jnp.dot(wk_ref[...], xk, preferred_element_type=jnp.float32) + bk_ref[...]
        v = jnp.dot(wv_ref[...], xv, preferred_element_type=jnp.float32) + bv_ref[...]
        k_sc[...] = k.astype(jnp.bfloat16)
        v_sc[...] = v.astype(jnp.bfloat16)

    # Query projection for this spatial tile (attention scale already folded in).
    xq = xq_ref[0]                                                    # (C, Tq) f32
    q = jnp.dot(wq_ref[...], xq, preferred_element_type=jnp.float32) + bq_ref[...]
    q = q.astype(jnp.bfloat16)

    # att[s, t] = sum_c k[c, s] * q[c, t]  -> (HW, Tq); contract C of both operands
    # directly (no k.T copy), bf16 inputs with f32 accumulation on the MXU.
    att = lax.dot_general(k_sc[...], q,
                          dimension_numbers=(((0,), (0,)), ((), ())),
                          preferred_element_type=jnp.float32)

    # Softmax over keys (axis 0, sublanes -> XLU reduce) with deferred normalization.
    att = att - jnp.max(att, axis=0, keepdims=True)
    e = jnp.exp(att)                                                  # (HW, Tq) f32
    denom = jnp.sum(e, axis=0, keepdims=True)                         # (1, Tq)

    # o = V @ exp(att)  -> (C, Tq); normalize the small output instead of e itself.
    o = jnp.dot(v_sc[...], e.astype(jnp.bfloat16),
                preferred_element_type=jnp.float32)
    o = o * pl.reciprocal(denom, approx=True)

    out_ref[0] = xq + o


def _pick_q_tile(hw):
    # Largest lane-aligned tile that divides HW and keeps the (HW, Tq) f32 score /
    # exp intermediates comfortably inside VMEM (~12 MiB budget for 3 copies).
    for t in (512, 256, 128):
        if hw % t == 0 and 3 * hw * t * 4 <= 12 * 1024 * 1024:
            return t
    return hw


def self_attention_pallas(query, key, value, wq, bq, wk, bk, wv, bv, *, tq=None):
    """query/key/value: (N, C, H, W) float32. Weights: (C, C); biases: (C,)."""
    N, C, H, W = query.shape
    HW = H * W
    if tq is None:
        tq = _pick_q_tile(HW)
    assert HW % tq == 0
    n_qt = HW // tq

    xq = query.reshape(N, C, HW)
    xk = key.reshape(N, C, HW)
    xv = value.reshape(N, C, HW)

    # Fold the 1/sqrt(C) attention scale into the query projection (host side).
    scale = 1.0 / jnp.sqrt(jnp.float32(C))
    wq_s = (wq * scale).astype(jnp.float32)
    bq_s = (bq * scale).reshape(C, 1).astype(jnp.float32)
    bk2 = bk.reshape(C, 1)
    bv2 = bv.reshape(C, 1)

    w_spec = pl.BlockSpec((C, C), lambda n, j: (0, 0))
    b_spec = pl.BlockSpec((C, 1), lambda n, j: (0, 0))
    # Full-spatial K/V blocks; index independent of the q-tile axis so they are
    # fetched once per batch element and stay resident across q tiles.
    kv_spec = pl.BlockSpec((1, C, HW), lambda n, j: (n, 0, 0))
    # Query / output tiled along the spatial (lane) axis -> lane-dense output stores.
    q_spec = pl.BlockSpec((1, C, tq), lambda n, j: (n, 0, j))

    # Explicit VMEM budget: double-buffered K/V + q/out tiles, bf16 K/V scratch,
    # (HW, Tq) score/exp intermediates; 1.5x headroom, clamped for all generations.
    est = (4 * C * HW * 4          # xk, xv (double-buffered, f32)
           + 4 * C * tq * 4        # xq, out (double-buffered, f32)
           + 2 * C * HW * 2        # bf16 K/V scratch
           + 3 * HW * tq * 4       # att / exp intermediates
           + 8 * C * tq * 4        # q / o temporaries
           + 6 * C * C * 4)        # weights / biases
    vmem_limit = max(32 * 1024 * 1024, min(int(est * 1.5), 64 * 1024 * 1024))

    out = pl.pallas_call(
        _self_attention_kernel,
        out_shape=jax.ShapeDtypeStruct((N, C, HW), jnp.float32),
        grid_spec=pltpu.PrefetchScalarGridSpec(
            num_scalar_prefetch=0,
            grid=(N, n_qt),
            in_specs=[w_spec, w_spec, w_spec,
                      b_spec, b_spec, b_spec,
                      q_spec, kv_spec, kv_spec],
            out_specs=q_spec,
            scratch_shapes=[pltpu.VMEM((C, HW), jnp.bfloat16),
                            pltpu.VMEM((C, HW), jnp.bfloat16)]),
        compiler_params=pltpu.CompilerParams(
            # q-tile axis must be sequential ("arbitrary") so the j==0 K/V cache
            # initialization runs before the later tiles of the same batch element;
            # batch axis is "parallel" for megacore sharding.
            dimension_semantics=("parallel", "arbitrary"),
            vmem_limit_bytes=vmem_limit),
    )(wq_s, wk, wv, bq_s, bk2, bv2, xq, xk, xv)

    return out.reshape(N, C, H, W)


def _reference(query, key, value, wq, bq, wk, bk, wv, bv):
    """Pure-JAX (f32) reference matching the PyTorch module semantics."""
    N, C, H, W = query.shape
    HW = H * W
    xq = query.reshape(N, C, HW)
    xk = key.reshape(N, C, HW)
    xv = value.reshape(N, C, HW)
    q = jnp.einsum('oc,ncs->nos', wq, xq) + bq[None, :, None]
    k = jnp.einsum('oc,ncs->nos', wk, xk) + bk[None, :, None]
    v = jnp.einsum('oc,ncs->nos', wv, xv) + bv[None, :, None]
    att = jnp.einsum('ncs,nct->nst', k, q) / jnp.sqrt(jnp.float32(C))
    att = jax.nn.softmax(att, axis=1)
    out = jnp.einsum('ncs,nst->nct', v, att)
    return query + out.reshape(N, C, H, W)


if __name__ == "__main__":
    N, C, H, W = 2, 4, 16, 16

    key0 = jax.random.PRNGKey(0)
    ks = jax.random.split(key0, 9)

    # Deterministic parameter init (1x1 conv weights flattened to (C_out, C_in)).
    scale = 1.0 / jnp.sqrt(jnp.float32(C))
    wq = jax.random.uniform(ks[0], (C, C), jnp.float32, -scale, scale)
    wk = jax.random.uniform(ks[1], (C, C), jnp.float32, -scale, scale)
    wv = jax.random.uniform(ks[2], (C, C), jnp.float32, -scale, scale)
    bq = jax.random.uniform(ks[3], (C,), jnp.float32, -scale, scale)
    bk = jax.random.uniform(ks[4], (C,), jnp.float32, -scale, scale)
    bv = jax.random.uniform(ks[5], (C,), jnp.float32, -scale, scale)

    query = jax.random.normal(ks[6], (N, C, H, W), jnp.float32)
    key_in = jax.random.normal(ks[7], (N, C, H, W), jnp.float32)
    value = jax.random.normal(ks[8], (N, C, H, W), jnp.float32)

    # tq=128 exercises the spatial-tiling path (HW=256 -> 2 q tiles per batch).
    out = self_attention_pallas(query, key_in, value, wq, bq, wk, bk, wv, bv, tq=128)
    out = jax.block_until_ready(out)

    ref = _reference(query, key_in, value, wq, bq, wk, bk, wv, bv)
    assert out.shape == (N, C, H, W)
    # Tolerance accounts for bf16 MXU matmuls + approx reciprocal in the kernel.
    assert jnp.allclose(out, ref, atol=2e-2, rtol=2e-2), "mismatch vs reference"

    print("KERNEL_OK")
</pallas_src>

<mosaic_0001>
module attributes {stable_mosaic.version = 11 : i64} {
  func.func @_self_attention_kernel(%arg0: i32, %arg1: i32, %arg2: memref<4x4xf32, #tpu.memory_space<vmem>>, %arg3: memref<4x4xf32, #tpu.memory_space<vmem>>, %arg4: memref<4x4xf32, #tpu.memory_space<vmem>>, %arg5: memref<4x1xf32, #tpu.memory_space<vmem>>, %arg6: memref<4x1xf32, #tpu.memory_space<vmem>>, %arg7: memref<4x1xf32, #tpu.memory_space<vmem>>, %arg8: memref<1x4x128xf32, #tpu.memory_space<vmem>>, %arg9: memref<1x4x256xf32, #tpu.memory_space<vmem>>, %arg10: memref<1x4x256xf32, #tpu.memory_space<vmem>>, %arg11: memref<1x4x128xf32, #tpu.memory_space<vmem>>, %arg12: memref<4x256xbf16, #tpu.memory_space<vmem>>, %arg13: memref<4x256xbf16, #tpu.memory_space<vmem>>) attributes {dimension_semantics = [#tpu.dimension_semantics<parallel>, #tpu.dimension_semantics<arbitrary>], iteration_bounds = array<i64: 2, 2>, scalar_prefetch = 0 : i64, scratch_operands = 2 : i64, tpu.core_type = #tpu.core_type<tc>, window_params = [{pipeline_mode = #tpu.pipeline_mode<synchronous>, transform_indices = @transform_0, window_bounds = array<i64: 4, 4>}, {pipeline_mode = #tpu.pipeline_mode<synchronous>, transform_indices = @transform_1, window_bounds = array<i64: 4, 4>}, {pipeline_mode = #tpu.pipeline_mode<synchronous>, transform_indices = @transform_2, window_bounds = array<i64: 4, 4>}, {pipeline_mode = #tpu.pipeline_mode<synchronous>, transform_indices = @transform_3, window_bounds = array<i64: 4, 1>}, {pipeline_mode = #tpu.pipeline_mode<synchronous>, transform_indices = @transform_4, window_bounds = array<i64: 4, 1>}, {pipeline_mode = #tpu.pipeline_mode<synchronous>, transform_indices = @transform_5, window_bounds = array<i64: 4, 1>}, {transform_indices = @transform_6, window_bounds = array<i64: 1, 4, 128>}, {transform_indices = @transform_7, window_bounds = array<i64: 1, 4, 256>}, {transform_indices = @transform_8, window_bounds = array<i64: 1, 4, 256>}, {transform_indices = @transform_9, window_bounds = array<i64: 1, 4, 128>}]} {
    %c0_i32 = arith.constant 0 : i32
    %0 = arith.cmpi eq, %arg1, %c0_i32 : i32
    %1 = arith.extui %0 : i1 to i32
    %c0_i32_0 = arith.constant 0 : i32
    %2 = arith.cmpi ne, %1, %c0_i32_0 : i32
    scf.if %2 {
      %c0_18 = arith.constant 0 : index
      %c0_19 = arith.constant 0 : index
      %c0_20 = arith.constant 0 : index
      %30 = vector.load %arg9[%c0_18, %c0_19, %c0_20] : memref<1x4x256xf32, #tpu.memory_space<vmem>>, vector<1x4x256xf32>
      %31 = vector.shape_cast %30 : vector<1x4x256xf32> to vector<4x256xf32>
      %c0_21 = arith.constant 0 : index
      %c0_22 = arith.constant 0 : index
      %c0_23 = arith.constant 0 : index
      %32 = vector.load %arg10[%c0_21, %c0_22, %c0_23] : memref<1x4x256xf32, #tpu.memory_space<vmem>>, vector<1x4x256xf32>
      %33 = vector.shape_cast %32 : vector<1x4x256xf32> to vector<4x256xf32>
      %c0_24 = arith.constant 0 : index
      %c0_25 = arith.constant 0 : index
      %34 = vector.load %arg3[%c0_24, %c0_25] : memref<4x4xf32, #tpu.memory_space<vmem>>, vector<4x4xf32>
      %cst_26 = arith.constant dense<0.000000e+00> : vector<4x256xf32>
      %35 = tpu.matmul %34, %31, %cst_26 {dimension_numbers = #tpu.dot_dimension_numbers<[1], [0], [0], [1], [0, 0, 1, 1], [], []>} : vector<4x4xf32>, vector<4x256xf32>, vector<4x256xf32> -> vector<4x256xf32>
      %c0_27 = arith.constant 0 : index
      %c0_28 = arith.constant 0 : index
      %36 = vector.load %arg6[%c0_27, %c0_28] : memref<4x1xf32, #tpu.memory_space<vmem>>, vector<4x1xf32>
      %37 = vector.broadcast %36 : vector<4x1xf32> to vector<4x256xf32>
      %38 = arith.addf %35, %37 : vector<4x256xf32>
      %c0_29 = arith.constant 0 : index
      %c0_30 = arith.constant 0 : index
      %39 = vector.load %arg4[%c0_29, %c0_30] : memref<4x4xf32, #tpu.memory_space<vmem>>, vector<4x4xf32>
      %cst_31 = arith.constant dense<0.000000e+00> : vector<4x256xf32>
      %40 = tpu.matmul %39, %33, %cst_31 {dimension_numbers = #tpu.dot_dimension_numbers<[1], [0], [0], [1], [0, 0, 1, 1], [], []>} : vector<4x4xf32>, vector<4x256xf32>, vector<4x256xf32> -> vector<4x256xf32>
      %c0_32 = arith.constant 0 : index
      %c0_33 = arith.constant 0 : index
      %41 = vector.load %arg7[%c0_32, %c0_33] : memref<4x1xf32, #tpu.memory_space<vmem>>, vector<4x1xf32>
      %42 = vector.broadcast %41 : vector<4x1xf32> to vector<4x256xf32>
      %43 = arith.addf %40, %42 : vector<4x256xf32>
      %44 = arith.truncf %38 : vector<4x256xf32> to vector<4x256xbf16>
      %c0_34 = arith.constant 0 : index
      %c0_35 = arith.constant 0 : index
      %45 = vector.load %arg12[%c0_34, %c0_35] : memref<4x256xbf16, #tpu.memory_space<vmem>>, vector<4x256xbf16>
      tpu.vector_store %arg12[%c0_34, %c0_35], %44 {strides = array<i32>} : memref<4x256xbf16, #tpu.memory_space<vmem>>, vector<4x256xbf16>,
      %46 = arith.truncf %43 : vector<4x256xf32> to vector<4x256xbf16>
      %c0_36 = arith.constant 0 : index
      %c0_37 = arith.constant 0 : index
      %47 = vector.load %arg13[%c0_36, %c0_37] : memref<4x256xbf16, #tpu.memory_space<vmem>>, vector<4x256xbf16>
      tpu.vector_store %arg13[%c0_36, %c0_37], %46 {strides = array<i32>} : memref<4x256xbf16, #tpu.memory_space<vmem>>, vector<4x256xbf16>,
    } else {
    }
    %c0 = arith.constant 0 : index
    %c0_1 = arith.constant 0 : index
    %c0_2 = arith.constant 0 : index
    %3 = vector.load %arg8[%c0, %c0_1, %c0_2] : memref<1x4x128xf32, #tpu.memory_space<vmem>>, vector<1x4x128xf32>
    %4 = vector.shape_cast %3 : vector<1x4x128xf32> to vector<4x128xf32>
    %c0_3 = arith.constant 0 : index
    %c0_4 = arith.constant 0 : index
    %5 = vector.load %arg2[%c0_3, %c0_4] : memref<4x4xf32, #tpu.memory_space<vmem>>, vector<4x4xf32>
    %cst = arith.constant dense<0.000000e+00> : vector<4x128xf32>
    %6 = tpu.matmul %5, %4, %cst {dimension_numbers = #tpu.dot_dimension_numbers<[1], [0], [0], [1], [0, 0, 1, 1], [], []>} : vector<4x4xf32>, vector<4x128xf32>, vector<4x128xf32> -> vector<4x128xf32>
    %c0_5 = arith.constant 0 : index
    %c0_6 = arith.constant 0 : index
    %7 = vector.load %arg5[%c0_5, %c0_6] : memref<4x1xf32, #tpu.memory_space<vmem>>, vector<4x1xf32>
    %8 = vector.broadcast %7 : vector<4x1xf32> to vector<4x128xf32>
    %9 = arith.addf %6, %8 : vector<4x128xf32>
    %10 = arith.truncf %9 : vector<4x128xf32> to vector<4x128xbf16>
    %c0_7 = arith.constant 0 : index
    %c0_8 = arith.constant 0 : index
    %11 = vector.load %arg12[%c0_7, %c0_8] : memref<4x256xbf16, #tpu.memory_space<vmem>>, vector<4x256xbf16>
    %cst_9 = arith.constant dense<0.000000e+00> : vector<256x128xf32>
    %12 = tpu.matmul %11, %10, %cst_9 {dimension_numbers = #tpu.dot_dimension_numbers<[0], [0], [1], [1], [0, 1, 1, 1], [], []>} : vector<4x256xbf16>, vector<4x128xbf16>, vector<256x128xf32> -> vector<256x128xf32>
    %cst_10 = arith.constant dense<0xFF800000> : vector<128xf32>
    %13 = vector.multi_reduction <maximumf>, %12, %cst_10 [0] : vector<256x128xf32> to vector<128xf32>
    %14 = vector.shape_cast %13 : vector<128xf32> to vector<1x128xf32>
    %15 = vector.broadcast %14 : vector<1x128xf32> to vector<256x128xf32>
    %16 = arith.subf %12, %15 : vector<256x128xf32>
    %17 = math.exp %16 : vector<256x128xf32>
    %cst_11 = arith.constant dense<0.000000e+00> : vector<128xf32>
    %18 = vector.multi_reduction <add>, %17, %cst_11 [0] : vector<256x128xf32> to vector<128xf32>
    %19 = vector.shape_cast %18 : vector<128xf32> to vector<1x128xf32>
    %c0_12 = arith.constant 0 : index
    %c0_13 = arith.constant 0 : index
    %20 = vector.load %arg13[%c0_12, %c0_13] : memref<4x256xbf16, #tpu.memory_space<vmem>>, vector<4x256xbf16>
    %21 = arith.truncf %17 : vector<256x128xf32> to vector<256x128xbf16>
    %cst_14 = arith.constant dense<0.000000e+00> : vector<4x128xf32>
    %22 = tpu.matmul %20, %21, %cst_14 {dimension_numbers = #tpu.dot_dimension_numbers<[1], [0], [0], [1], [0, 0, 1, 1], [], []>} : vector<4x256xbf16>, vector<256x128xbf16>, vector<4x128xf32> -> vector<4x128xf32>
    %23 = tpu.reciprocal %19 {approx = true} : vector<1x128xf32> -> vector<1x128xf32>
    %24 = vector.broadcast %23 : vector<1x128xf32> to vector<4x128xf32>
    %25 = arith.mulf %22, %24 : vector<4x128xf32>
    %26 = arith.addf %4, %25 : vector<4x128xf32>
    %c0_15 = arith.constant 0 : index
    %c0_16 = arith.constant 0 : index
    %c0_17 = arith.constant 0 : index
    %27 = vector.load %arg11[%c0_15, %c0_16, %c0_17] : memref<1x4x128xf32, #tpu.memory_space<vmem>>, vector<1x4x128xf32>
    %28 = vector.shape_cast %27 : vector<1x4x128xf32> to vector<4x128xf32>
    %29 = vector.shape_cast %26 : vector<4x128xf32> to vector<1x4x128xf32>
    tpu.vector_store %arg11[%c0_15, %c0_16, %c0_17], %29 {strides = array<i32>} : memref<1x4x128xf32, #tpu.memory_space<vmem>>, vector<1x4x128xf32>,
    return
  }
  func.func @transform_0(%arg0: i32, %arg1: i32) -> (i32, i32) {
    %c0_i32 = arith.constant 0 : i32
    %c0_i32_0 = arith.constant 0 : i32
    %c0_i32_1 = arith.constant 0 : i32
    return %c0_i32, %c0_i32_0 : i32, i32
  }
  func.func @transform_1(%arg0: i32, %arg1: i32) -> (i32, i32) {
    %c0_i32 = arith.constant 0 : i32
    %c0_i32_0 = arith.constant 0 : i32
    %c0_i32_1 = arith.constant 0 : i32
    return %c0_i32, %c0_i32_0 : i32, i32
  }
  func.func @transform_2(%arg0: i32, %arg1: i32) -> (i32, i32) {
    %c0_i32 = arith.constant 0 : i32
    %c0_i32_0 = arith.constant 0 : i32
    %c0_i32_1 = arith.constant 0 : i32
    return %c0_i32, %c0_i32_0 : i32, i32
  }
  func.func @transform_3(%arg0: i32, %arg1: i32) -> (i32, i32) {
    %c0_i32 = arith.constant 0 : i32
    %c0_i32_0 = arith.constant 0 : i32
    %c0_i32_1 = arith.constant 0 : i32
    return %c0_i32, %c0_i32_0 : i32, i32
  }
  func.func @transform_4(%arg0: i32, %arg1: i32) -> (i32, i32) {
    %c0_i32 = arith.constant 0 : i32
    %c0_i32_0 = arith.constant 0 : i32
    %c0_i32_1 = arith.constant 0 : i32
    return %c0_i32, %c0_i32_0 : i32, i32
  }
  func.func @transform_5(%arg0: i32, %arg1: i32) -> (i32, i32) {
    %c0_i32 = arith.constant 0 : i32
    %c0_i32_0 = arith.constant 0 : i32
    %c0_i32_1 = arith.constant 0 : i32
    return %c0_i32, %c0_i32_0 : i32, i32
  }
  func.func @transform_6(%arg0: i32, %arg1: i32) -> (i32, i32, i32) {
    %c0_i32 = arith.constant 0 : i32
    %c0_i32_0 = arith.constant 0 : i32
    return %arg0, %c0_i32, %arg1 : i32, i32, i32
  }
  func.func @transform_7(%arg0: i32, %arg1: i32) -> (i32, i32, i32) {
    %c0_i32 = arith.constant 0 : i32
    %c0_i32_0 = arith.constant 0 : i32
    %c0_i32_1 = arith.constant 0 : i32
    return %arg0, %c0_i32, %c0_i32_0 : i32, i32, i32
  }
  func.func @transform_8(%arg0: i32, %arg1: i32) -> (i32, i32, i32) {
    %c0_i32 = arith.constant 0 : i32
    %c0_i32_0 = arith.constant 0 : i32
    %c0_i32_1 = arith.constant 0 : i32
    return %arg0, %c0_i32, %c0_i32_0 : i32, i32, i32
  }
  func.func @transform_9(%arg0: i32, %arg1: i32) -> (i32, i32, i32) {
    %c0_i32 = arith.constant 0 : i32
    %c0_i32_0 = arith.constant 0 : i32
    return %arg0, %c0_i32, %arg1 : i32, i32, i32
  }
}

</mosaic_0001>

<llo_original>
// kernel: tpu_custom_call.1
$region0: #{tpu_custom_call.1}
  #allocation0 [shape = 'u32[]', space=smem, size = 0x4, offset = 0x4, fixed_abs, tag = 'smem constant byte address 0x4 - core index']
  #allocation1 [shape = 'u32[144,128]{1,0:T(1,128)}', space=vmem, size = 0x12000, scoped, tag = 'internal scratch']
  #allocation2 [shape = 'bf16[4,256]{1,0:T(4,128)(2,1)}', space=vmem, size = 0x800, scoped, tag = 'scratch operand']
  #allocation3 [shape = 'bf16[4,256]{1,0:T(4,128)(2,1)}', space=vmem, size = 0x800, scoped, tag = 'scratch operand']
  %s0 = inlined_call_operand.vmem [shape: f32[4,4], index: 0, kind: input, shape index: {}]
  %s1 = inlined_call_operand.vmem [shape: f32[4,4], index: 1, kind: input, shape index: {}]
  %s2 = inlined_call_operand.hbm [shape: f32[4,4], index: 2, kind: input, shape index: {}]
  %s3 = inlined_call_operand.vmem [shape: f32[4,1], index: 3, kind: input, shape index: {}]
  %s4 = inlined_call_operand.vmem [shape: f32[4,1], index: 4, kind: input, shape index: {}]
  %s5 = inlined_call_operand.vmem [shape: f32[4,1], index: 5, kind: input, shape index: {}]
  %s6 = inlined_call_operand.vmem [shape: f32[2,4,256], index: 6, kind: input, shape index: {}]
  %s7 = inlined_call_operand.hbm [shape: f32[2,4,256], index: 7, kind: input, shape index: {}]
  %s8 = inlined_call_operand.hbm [shape: f32[2,4,256], index: 8, kind: input, shape index: {}]
  %s9 = inlined_call_operand.hbm [shape: f32[2,4,256], index: 9, kind: output, shape index: {}]
  %s10 = sld [smem:[#allocation0]]
  $region85: #{tpu_custom_call.1} parent=0
    _
  %s12 = ssub.s32 1, %s10
  %s13 = scalar_select 0, %s12, %s10
  $region1: #{tpu_custom_call.1} parent=0
    #allocation4 [shape = 'u8[2048]{0}', space=vmem, size = 0x800, scoped, tag = 'input window, operand 2, single buffered']
    #allocation5 [shape = 's32[2]{0}', space=sflag, size = 0x8, scoped, tag = 'scoped memory for tpu_custom_call.1']
    #allocation6 [shape = 's32[2]{0}', space=sflag, size = 0x8, scoped, tag = 'scoped memory for tpu_custom_call.1']
    #allocation7 [shape = 'u8[8192]{0}', space=vmem, size = 0x2000, scoped, tag = 'input window, operand 7']
    #allocation8 [shape = 's32[2]{0}', space=sflag, size = 0x8, scoped, tag = 'scoped memory for tpu_custom_call.1']
    #allocation9 [shape = 'u8[8192]{0}', space=vmem, size = 0x2000, scoped, tag = 'input window, operand 8']
    #allocation10 [shape = 'u8[4096]{0}', space=vmem, size = 0x1000, scoped, tag = 'output window, operand 0']
    %14 = vsyncpa [#allocation5], 0
    %15 = vsyncpa [#allocation8], 0
    %s16 = scalar_lea.sflag [#allocation8], 1
    %17 = vsyncpa %s16, 0
    %18 = vsyncpa [#allocation6], 0
    %s19 = scalar_lea.sflag [#allocation6], 1
    %20 = vsyncpa %s19, 0
    loop: start=0, step=1, limit=6
    $region2: #{tpu_custom_call.1} parent=1 // loop_pre_header
      _
    $region3: #{tpu_custom_call.1} parent=1 // loop_header
      %s22 = sphi 0, %s26
      %p23 = scmp.ge.s32.totalorder %s22, 6
      %s29 = sphi 0, %s41
      %s30 = sphi 0, %s37
      %s31 = sphi 0, %s29
      %s32 = sphi 0, %s30
      %s33 = sphi 0, %s31
      %s34 = sphi 0, %s32
      %s42 = sphi 0, %s42
      %s44 = sphi 0, %s42
      %s45 = sphi 0, %s44
      %s59 = sphi 0, %s45
      %s63 = sphi 0, %s63
      %s65 = sphi 0, %s63
      %s66 = sphi 0, %s65
      %s80 = sphi 0, %s66
      %s84 = sphi 0, %s84
      %s86 = sphi 0, %s84
      %s87 = sphi 0, %s86
      %s101 = sphi 0, %s87
      %s105 = sphi 0, %s105
      %s107 = sphi 0, %s105
      %s108 = sphi 0, %s107
      %s122 = sphi 0, %s108
      %s126 = sphi 0, %s126
      %s128 = sphi 0, %s126
      %s129 = sphi 0, %s128
      %s143 = sphi 0, %s129
      %s147 = sphi 0, %s147
      %s149 = sphi 0, %s147
      %s150 = sphi 0, %s149
      %s164 = sphi 0, %s150
      %s172 = sphi 0, %s174
      %s175 = sphi 0, %s172
      %s176 = sphi 0, %s175
      %s192 = sphi 0, %s176
      %s198 = sphi 0, %s200
      %s201 = sphi 0, %s198
      %s202 = sphi 0, %s201
      %s218 = sphi 0, %s202
      %s224 = sphi 0, %s226
      %s227 = sphi 0, %s224
      %s228 = sphi 0, %s227
      %s244 = sphi 0, %s228
      %s252 = sphi 0, %s254
      %s255 = sphi 0, %s252
      %s256 = sphi 0, %s255
      %s272 = sphi 0, %s256
    $region4: #{tpu_custom_call.1} parent=1 // loop_header_branch
      %25 = sbr.rel (%p23) target = $region8
    $region5: #{tpu_custom_call.1} parent=1 // loop_body
      %s27 = ssub.s32 %s22, 1
      %s28 = ssub.s32 %s22, 2
      %s35 = sadd.s32 1, %s30
      %p36 = scmp.ge.s32.totalorder %s35, 2
      %s37 = scalar_select %p36, 0, %s35
      %s38 = sadd.s32 1, %s29
      %s39 = scalar_select %p36, %s38, %s29
      %p40 = scmp.ge.s32.totalorder %s39, 2
      %s41 = scalar_select %p40, 0, %s39
      %s43 = sadd.s32 %s42, 1
      %p46 = scmp.eq.s32.totalorder %s22, 3
      %p47 = scmp.ne.s32.totalorder %s42, %s44
      %p48 = scmp.eq.s32.totalorder %s22, 0
      %p49 = por %p47, %p48
      %p50 = scmp.ne.s32.totalorder %s42, %s44
      %p51 = scmp.eq.s32.totalorder %s27, 3
      %p52 = por %p50, %p51
      %p53 = scmp.ne.s32.totalorder %s44, %s45
      %p54 = scmp.eq.s32.totalorder %s27, 0
      %p55 = por %p53, %p54
      %p56 = scmp.ne.s32.totalorder %s44, %s45
      %p57 = scmp.eq.s32.totalorder %s28, 3
      %p58 = por %p56, %p57
      %p60 = scmp.ne.s32.totalorder %s45, %s59
      %p61 = scmp.eq.s32.totalorder %s28, 0
      %p62 = por %p60, %p61
      %s64 = sadd.s32 %s63, 1
      %p67 = scmp.eq.s32.totalorder %s22, 3
      %p68 = scmp.ne.s32.totalorder %s63, %s65
      %p69 = scmp.eq.s32.totalorder %s22, 0
      %p70 = por %p68, %p69
      %p71 = scmp.ne.s32.totalorder %s63, %s65
      %p72 = scmp.eq.s32.totalorder %s27, 3
      %p73 = por %p71, %p72
      %p74 = scmp.ne.s32.totalorder %s65, %s66
      %p75 = scmp.eq.s32.totalorder %s27, 0
      %p76 = por %p74, %p75
      %p77 = scmp.ne.s32.totalorder %s65, %s66
      %p78 = scmp.eq.s32.totalorder %s28, 3
      %p79 = por %p77, %p78
      %p81 = scmp.ne.s32.totalorder %s66, %s80
      %p82 = scmp.eq.s32.totalorder %s28, 0
      %p83 = por %p81, %p82
      %s85 = sadd.s32 %s84, 1
      %p88 = scmp.eq.s32.totalorder %s22, 3
      %p89 = scmp.ne.s32.totalorder %s84, %s86
      %p90 = scmp.eq.s32.totalorder %s22, 0
      %p91 = por %p89, %p90
      %p92 = scmp.ne.s32.totalorder %s84, %s86
      %p93 = scmp.eq.s32.totalorder %s27, 3
      %p94 = por %p92, %p93
      %p95 = scmp.ne.s32.totalorder %s86, %s87
      %p96 = scmp.eq.s32.totalorder %s27, 0
      %p97 = por %p95, %p96
      %p98 = scmp.ne.s32.totalorder %s86, %s87
      %p99 = scmp.eq.s32.totalorder %s28, 3
      %p100 = por %p98, %p99
      %p102 = scmp.ne.s32.totalorder %s87, %s101
      %p103 = scmp.eq.s32.totalorder %s28, 0
      %p104 = por %p102, %p103
      %s106 = sadd.s32 %s105, 1
      %p109 = scmp.eq.s32.totalorder %s22, 3
      %p110 = scmp.ne.s32.totalorder %s105, %s107
      %p111 = scmp.eq.s32.totalorder %s22, 0
      %p112 = por %p110, %p111
      %p113 = scmp.ne.s32.totalorder %s105, %s107
      %p114 = scmp.eq.s32.totalorder %s27, 3
      %p115 = por %p113, %p114
      %p116 = scmp.ne.s32.totalorder %s107, %s108
      %p117 = scmp.eq.s32.totalorder %s27, 0
      %p118 = por %p116, %p117
      %p119 = scmp.ne.s32.totalorder %s107, %s108
      %p120 = scmp.eq.s32.totalorder %s28, 3
      %p121 = por %p119, %p120
      %p123 = scmp.ne.s32.totalorder %s108, %s122
      %p124 = scmp.eq.s32.totalorder %s28, 0
      %p125 = por %p123, %p124
      %s127 = sadd.s32 %s126, 1
      %p130 = scmp.eq.s32.totalorder %s22, 3
      %p131 = scmp.ne.s32.totalorder %s126, %s128
      %p132 = scmp.eq.s32.totalorder %s22, 0
      %p133 = por %p131, %p132
      %p134 = scmp.ne.s32.totalorder %s126, %s128
      %p135 = scmp.eq.s32.totalorder %s27, 3
      %p136 = por %p134, %p135
      %p137 = scmp.ne.s32.totalorder %s128, %s129
      %p138 = scmp.eq.s32.totalorder %s27, 0
      %p139 = por %p137, %p138
      %p140 = scmp.ne.s32.totalorder %s128, %s129
      %p141 = scmp.eq.s32.totalorder %s28, 3
      %p142 = por %p140, %p141
      %p144 = scmp.ne.s32.totalorder %s129, %s143
      %p145 = scmp.eq.s32.totalorder %s28, 0
      %p146 = por %p144, %p145
      %s148 = sadd.s32 %s147, 1
      %p151 = scmp.eq.s32.totalorder %s22, 3
      %p152 = scmp.ne.s32.totalorder %s147, %s149
      %p153 = scmp.eq.s32.totalorder %s22, 0
      %p154 = por %p152, %p153
      %p155 = scmp.ne.s32.totalorder %s147, %s149
      %p156 = scmp.eq.s32.totalorder %s27, 3
      %p157 = por %p155, %p156
      %p158 = scmp.ne.s32.totalorder %s149, %s150
      %p159 = scmp.eq.s32.totalorder %s27, 0
      %p160 = por %p158, %p159
      %p161 = scmp.ne.s32.totalorder %s149, %s150
      %p162 = scmp.eq.s32.totalorder %s28, 3
      %p163 = por %p161, %p162
      %p165 = scmp.ne.s32.totalorder %s150, %s164
      %p166 = scmp.eq.s32.totalorder %s28, 0
      %p167 = por %p165, %p166
      %s168 = ssub.s32 %s29, %s41
      %s169 = ssub.s32 %s30, %s37
      %s170 = sor.u32 %s168, %s169
      %p171 = scmp.eq.s32.totalorder %s170, 0
      %s173 = sadd.s32 %s172, 1
      %s174 = scalar_select %p171, %s172, %s173
      %p177 = pneg %p171
      %p178 = scmp.eq.s32.totalorder %s22, 3
      %p179 = por %p177, %p178
      %p180 = scmp.ne.s32.totalorder %s172, %s175
      %p181 = scmp.eq.s32.totalorder %s22, 0
      %p182 = por %p180, %p181
      %p183 = scmp.ne.s32.totalorder %s172, %s175
      %p184 = scmp.eq.s32.totalorder %s27, 3
      %p185 = por %p183, %p184
      %p186 = scmp.ne.s32.totalorder %s175, %s176
      %p187 = scmp.eq.s32.totalorder %s27, 0
      %p188 = por %p186, %p187
      %p189 = scmp.ne.s32.totalorder %s175, %s176
      %p190 = scmp.eq.s32.totalorder %s28, 3
      %p191 = por %p189, %p190
      %p193 = scmp.ne.s32.totalorder %s176, %s192
      %p194 = scmp.eq.s32.totalorder %s28, 0
      %p195 = por %p193, %p194
      %s196 = ssub.s32 %s29, %s41
      %p197 = scmp.eq.s32.totalorder %s196, 0
      %s199 = sadd.s32 %s198, 1
      %s200 = scalar_select %p197, %s198, %s199
      %p203 = pneg %p197
      %p204 = scmp.eq.s32.totalorder %s22, 3
      %p205 = por %p203, %p204
      %p206 = scmp.ne.s32.totalorder %s198, %s201
      %p207 = scmp.eq.s32.totalorder %s22, 0
      %p208 = por %p206, %p207
      %p209 = scmp.ne.s32.totalorder %s198, %s201
      %p210 = scmp.eq.s32.totalorder %s27, 3
      %p211 = por %p209, %p210
      %p212 = scmp.ne.s32.totalorder %s201, %s202
      %p213 = scmp.eq.s32.totalorder %s27, 0
      %p214 = por %p212, %p213
      %p215 = scmp.ne.s32.totalorder %s201, %s202
      %p216 = scmp.eq.s32.totalorder %s28, 3
      %p217 = por %p215, %p216
      %p219 = scmp.ne.s32.totalorder %s202, %s218
      %p220 = scmp.eq.s32.totalorder %s28, 0
      %p221 = por %p219, %p220
      %s222 = ssub.s32 %s29, %s41
      %p223 = scmp.eq.s32.totalorder %s222, 0
      %s225 = sadd.s32 %s224, 1
      %s226 = scalar_select %p223, %s224, %s225
      %p229 = pneg %p223
      %p230 = scmp.eq.s32.totalorder %s22, 3
      %p231 = por %p229, %p230
      %p232 = scmp.ne.s32.totalorder %s224, %s227
      %p233 = scmp.eq.s32.totalorder %s22, 0
      %p234 = por %p232, %p233
      %p235 = scmp.ne.s32.totalorder %s224, %s227
      %p236 = scmp.eq.s32.totalorder %s27, 3
      %p237 = por %p235, %p236
      %p238 = scmp.ne.s32.totalorder %s227, %s228
      %p239 = scmp.eq.s32.totalorder %s27, 0
      %p240 = por %p238, %p239
      %p241 = scmp.ne.s32.totalorder %s227, %s228
      %p242 = scmp.eq.s32.totalorder %s28, 3
      %p243 = por %p241, %p242
      %p245 = scmp.ne.s32.totalorder %s228, %s244
      %p246 = scmp.eq.s32.totalorder %s28, 0
      %p247 = por %p245, %p246
      %s248 = ssub.s32 %s29, %s41
      %s249 = ssub.s32 %s30, %s37
      %s250 = sor.u32 %s248, %s249
      %p251 = scmp.eq.s32.totalorder %s250, 0
      %s253 = sadd.s32 %s252, 1
      %s254 = scalar_select %p251, %s252, %s253
      %p257 = pneg %p251
      %p258 = scmp.eq.s32.totalorder %s22, 3
      %p259 = por %p257, %p258
      %p260 = scmp.ne.s32.totalorder %s252, %s255
      %p261 = scmp.eq.s32.totalorder %s22, 0
      %p262 = por %p260, %p261
      %p263 = scmp.ne.s32.totalorder %s252, %s255
      %p264 = scmp.eq.s32.totalorder %s27, 3
      %p265 = por %p263, %p264
      %p266 = scmp.ne.s32.totalorder %s255, %s256
      %p267 = scmp.eq.s32.totalorder %s27, 0
      %p268 = por %p266, %p267
      %p269 = scmp.ne.s32.totalorder %s255, %s256
      %p270 = scmp.eq.s32.totalorder %s28, 3
      %p271 = por %p269, %p270
      %p273 = scmp.ne.s32.totalorder %s256, %s272
      %p274 = scmp.eq.s32.totalorder %s28, 0
      %p275 = por %p273, %p274
      %p276 = scmp.le.s32.totalorder 1, %s22
      %p277 = scmp.lt.s32.totalorder %s22, 5
      %p278 = pnand %p276, %p277
      %p279 = pneg %p278
      // Predicated region
      $region9: #{tpu_custom_call.1} parent=5 // pred_check
        _
      $region10: #{tpu_custom_call.1} parent=5 // pred_check_branch
        %281 = sbr.rel (%p278) target = $region12
      $region11: #{tpu_custom_call.1} parent=5 // pred_region
        %s282 = ssub.s32 %s22, 1
        // Predicated region
        $region13: #{tpu_custom_call.1} parent=11 // pred_check
          %p283 = pneg %p55
        $region14: #{tpu_custom_call.1} parent=11 // pred_check_branch
          %285 = sbr.rel (%p283) target = $region16
        $region15: #{tpu_custom_call.1} parent=11 // pred_region
          _
        $region16: #{tpu_custom_call.1} parent=11 // pred_fallthru
          _
        // Predicated region
        $region17: #{tpu_custom_call.1} parent=11 // pred_check
          %p286 = pneg %p76
        $region18: #{tpu_custom_call.1} parent=11 // pred_check_branch
          %288 = sbr.rel (%p286) target = $region20
        $region19: #{tpu_custom_call.1} parent=11 // pred_region
          _
        $region20: #{tpu_custom_call.1} parent=11 // pred_fallthru
          _
        // Predicated region
        $region21: #{tpu_custom_call.1} parent=11 // pred_check
          %p289 = pneg %p97
        $region22: #{tpu_custom_call.1} parent=11 // pred_check_branch
          %291 = sbr.rel (%p289) target = $region24
        $region23: #{tpu_custom_call.1} parent=11 // pred_region
          %s293 = ssub.s32 64, 64
          %294 = vsyncadd [#allocation5], %s293
          %s296 = sshll.u32 [#allocation4], 4
          %s297 = int_to_ptr.vmem [resolvable:$true] %s296
          %299 = dma.hbm_to_vmem [thread:$0]  %s2, 64, %s297, [#allocation5]
        $region24: #{tpu_custom_call.1} parent=11 // pred_fallthru
          _
        // Predicated region
        $region25: #{tpu_custom_call.1} parent=11 // pred_check
          %p300 = pneg %p118
        $region26: #{tpu_custom_call.1} parent=11 // pred_check_branch
          %302 = sbr.rel (%p300) target = $region28
        $region27: #{tpu_custom_call.1} parent=11 // pred_region
          _
        $region28: #{tpu_custom_call.1} parent=11 // pred_fallthru
          _
        // Predicated region
        $region29: #{tpu_custom_call.1} parent=11 // pred_check
          %p303 = pneg %p139
        $region30: #{tpu_custom_call.1} parent=11 // pred_check_branch
          %305 = sbr.rel (%p303) target = $region32
        $region31: #{tpu_custom_call.1} parent=11 // pred_region
          _
        $region32: #{tpu_custom_call.1} parent=11 // pred_fallthru
          _
        // Predicated region
        $region33: #{tpu_custom_call.1} parent=11 // pred_check
          %p306 = pneg %p160
        $region34: #{tpu_custom_call.1} parent=11 // pred_check_branch
          %308 = sbr.rel (%p306) target = $region36
        $region35: #{tpu_custom_call.1} parent=11 // pred_region
          _
        $region36: #{tpu_custom_call.1} parent=11 // pred_fallthru
          _
      $region12: #{tpu_custom_call.1} parent=5 // pred_fallthru
        _
      %p309 = scmp.lt.s32.totalorder %s22, 4
      // Predicated region
      $region37: #{tpu_custom_call.1} parent=5 // pred_check
        %p310 = pneg %p309
      $region38: #{tpu_custom_call.1} parent=5 // pred_check_branch
        %312 = sbr.rel (%p310) target = $region40
      $region39: #{tpu_custom_call.1} parent=5 // pred_region
        // Predicated region
        $region41: #{tpu_custom_call.1} parent=39 // pred_check
          %p313 = pneg %p182
        $region42: #{tpu_custom_call.1} parent=39 // pred_check_branch
          %315 = sbr.rel (%p313) target = $region44
        $region43: #{tpu_custom_call.1} parent=39 // pred_region
          %p316 = scmp.lt.s32.totalorder %s29, 1
          %s317 = scalar_select %p316, %s29, 1
          %p318 = scmp.lt.s32.totalorder %s30, 1
          %s319 = scalar_select %p318, %s30, 1
          %s320 = smul.addr %s317, 2
          %s321 = sadd.s32 %s319, %s320
          %s322 = smul.addr %s321, 4
          %s323 = scalar_lea.vmem %s6, %s322
        $region44: #{tpu_custom_call.1} parent=39 // pred_fallthru
          _
        // Predicated region
        $region45: #{tpu_custom_call.1} parent=39 // pred_check
          %p324 = pneg %p208
        $region46: #{tpu_custom_call.1} parent=39 // pred_check_branch
          %326 = sbr.rel (%p324) target = $region48
        $region47: #{tpu_custom_call.1} parent=39 // pred_region
          %s327 = sand.u32 %s22, 1
          %s328 = scalar_lea.sflag [#allocation8], %s327
          %s329 = sand.u32 %s198, 1
          %s330 = smul.addr %s329, 8
          %s331 = scalar_lea.vmem [#allocation7], %s330
          %s333 = ssub.s32 128, 128
          %334 = vsyncadd %s328, %s333
          %s335 = smul.addr %s29, 2
          %s336 = smul.addr %s335, 64
          %s337 = scalar_lea.hbm %s7, %s336
          %s339 = sshll.u32 %s331, 4
          %s340 = int_to_ptr.vmem [resolvable:$true] %s339
          %342 = dma.hbm_to_vmem [thread:$0]  %s337, 128, %s340, %s328
        $region48: #{tpu_custom_call.1} parent=39 // pred_fallthru
          _
        // Predicated region
        $region49: #{tpu_custom_call.1} parent=39 // pred_check
          %p343 = pneg %p234
        $region50: #{tpu_custom_call.1} parent=39 // pred_check_branch
          %345 = sbr.rel (%p343) target = $region52
        $region51: #{tpu_custom_call.1} parent=39 // pred_region
          %s346 = sand.u32 %s22, 1
          %s347 = scalar_lea.sflag [#allocation8], %s346
          %s348 = sand.u32 %s224, 1
          %s349 = smul.addr %s348, 8
          %s350 = scalar_lea.vmem [#allocation9], %s349
          %s352 = ssub.s32 128, 128
          %353 = vsyncadd %s347, %s352
          %s354 = smul.addr %s29, 2
          %s355 = smul.addr %s354, 64
          %s356 = scalar_lea.hbm %s8, %s355
          %s358 = sshll.u32 %s350, 4
          %s359 = int_to_ptr.vmem [resolvable:$true] %s358
          %361 = dma.hbm_to_vmem [thread:$0]  %s356, 128, %s359, %s347
        $region52: #{tpu_custom_call.1} parent=39 // pred_fallthru
          _
      $region40: #{tpu_custom_call.1} parent=5 // pred_fallthru
        _
      %p362 = scmp.le.s32.totalorder 1, %s22
      %p363 = scmp.lt.s32.totalorder %s22, 5
      %p364 = pnand %p362, %p363
      %p365 = pneg %p364
      // Predicated region
      $region53: #{tpu_custom_call.1} parent=5 // pred_check
        _
      $region54: #{tpu_custom_call.1} parent=5 // pred_check_branch
        %367 = sbr.rel (%p364) target = $region56
      $region55: #{tpu_custom_call.1} parent=5 // pred_region
        %s368 = ssub.s32 %s22, 1
        // Predicated region
        $region57: #{tpu_custom_call.1} parent=55 // pred_check
          %p369 = pneg %p97
        $region58: #{tpu_custom_call.1} parent=55 // pred_check_branch
          %371 = sbr.rel (%p369) target = $region60
        $region59: #{tpu_custom_call.1} parent=55 // pred_region
          %372 = dma.done [#allocation5], 64
        $region60: #{tpu_custom_call.1} parent=55 // pred_fallthru
          _
        %s373 = sand.u32 %s27, 1
        %s374 = scalar_lea.sflag [#allocation8], %s373
        %s375 = sand.u32 %s201, 1
        %s376 = smul.addr %s375, 8
        %s377 = scalar_lea.vmem [#allocation7], %s376
        // Predicated region
        $region61: #{tpu_custom_call.1} parent=55 // pred_check
          %p378 = pneg %p214
        $region62: #{tpu_custom_call.1} parent=55 // pred_check_branch
          %380 = sbr.rel (%p378) target = $region64
        $region63: #{tpu_custom_call.1} parent=55 // pred_region
          %381 = dma.done %s374, 128
        $region64: #{tpu_custom_call.1} parent=55 // pred_fallthru
          _
        %s382 = sand.u32 %s27, 1
        %s383 = scalar_lea.sflag [#allocation8], %s382
        %s384 = sand.u32 %s227, 1
        %s385 = smul.addr %s384, 8
        %s386 = scalar_lea.vmem [#allocation9], %s385
        // Predicated region
        $region65: #{tpu_custom_call.1} parent=55 // pred_check
          %p387 = pneg %p240
        $region66: #{tpu_custom_call.1} parent=55 // pred_check_branch
          %389 = sbr.rel (%p387) target = $region68
        $region67: #{tpu_custom_call.1} parent=55 // pred_region
          %390 = dma.done %s383, 128
        $region68: #{tpu_custom_call.1} parent=55 // pred_fallthru
          _
        %p391 = pneg %p55
        %p392 = pneg %p52
        %p393 = pneg %p76
        %p394 = pneg %p73
        %p395 = pneg %p97
        %p396 = pneg %p94
        %p397 = pneg %p118
        %p398 = pneg %p115
        %p399 = pneg %p139
        %p400 = pneg %p136
        %p401 = pneg %p160
        %p402 = pneg %p157
        %p403 = scmp.lt.s32.totalorder %s31, 1
        %s404 = scalar_select %p403, %s31, 1
        %p405 = scmp.lt.s32.totalorder %s32, 1
        %s406 = scalar_select %p405, %s32, 1
        %s407 = smul.addr %s404, 2
        %s408 = sadd.s32 %s406, %s407
        %s409 = smul.addr %s408, 4
        %s410 = scalar_lea.vmem %s6, %s409
        %p411 = pneg %p188
        %p412 = pneg %p185
        %s413 = sand.u32 %s27, 1
        %s414 = scalar_lea.sflag [#allocation8], %s413
        %s415 = sand.u32 %s201, 1
        %s416 = smul.addr %s415, 8
        %s417 = scalar_lea.vmem [#allocation7], %s416
        %p418 = pneg %p214
        %p419 = pneg %p211
        %s420 = sand.u32 %s27, 1
        %s421 = scalar_lea.sflag [#allocation8], %s420
        %s422 = sand.u32 %s227, 1
        %s423 = smul.addr %s422, 8
        %s424 = scalar_lea.vmem [#allocation9], %s423
        %p425 = pneg %p240
        %p426 = pneg %p237
        %p427 = pneg %p268
        %p428 = pneg %p265
        %s429 = sand.u32 %s255, 1
        %s430 = scalar_lea.sflag [#allocation6], %s429
        %s431 = sand.u32 %s255, 1
        %s432 = smul.addr %s431, 4
        %s433 = scalar_lea.vmem [#allocation10], %s432
        %p434 = scmp.lt.s32.totalorder %s31, 1
        %s435 = scalar_select %p434, %s31, 1
        %p436 = scmp.lt.s32.totalorder %s32, 1
        %s437 = scalar_select %p436, %s32, 1
        %s438 = smul.addr %s435, 2
        %s439 = sadd.s32 %s437, %s438
        %s440 = smul.addr %s439, 4
        %s441 = scalar_lea.vmem %s6, %s440
        %p443 = scmp.eq.s32.totalorder %s32, 0
        // Predicated region
        $region69: #{tpu_custom_call.1} parent=55 // pred_check
          %p444 = pneg %p443
        $region70: #{tpu_custom_call.1} parent=55 // pred_check_branch
          %446 = sbr.rel (%p444) target = $region72
        $region71: #{tpu_custom_call.1} parent=55 // pred_region
          %v447 = vld [vmem:[%s377] sm:$0xff]
          %v448 = vld [vmem:[%s386] sm:$0xff]
          %v449 = vld [vmem:[%s1] sm:$0xf]
          %v450 = vld [vmem:[%s4] sm:$0xf]
          %452 = vset.pattern.permute.xlu0 0
          %453 = vperm.xlu0 %452, %v450
          %v454 = vpop.permute.xlu0 %453
          %v457 = vcombine.high %v447, %v447
          %vm458 = vcmask 31744
          %v460 = vsel %vm458, %v449, 0
          %vm462 = vcmask 1043456
          %v463 = vsel %vm462, %v447, 0
          %v465 = vsel %vm462, %v457, 0
          %467 = vmatprep.subr.mxu0 0.0
          %468 = vmatpush1.msra.mxu0 0.0
          %469 = vmatprep.subr.mxu0 0.0
          %470 = vmatpush1.msra.mxu0 0.0
          %471 = vmatprep.subr.mxu0 0.0
          %472 = vmatpush1.msra.mxu0 0.0
          %473 = vmatprep.subr.mxu0 0.0
          %474 = vmatpush1.msra.mxu0 0.0
          %475 = vmatprep.subr.mxu0 0.0
          %476 = vmatpush1.msra.mxu0 0.0
          %477 = vmatprep.subr.mxu0 0.0
          %478 = vmatpush1.msra.mxu0 0.0
          %479 = vmatprep.subr.mxu0 0.0
          %480 = vmatpush1.msra.mxu0 0.0
          %481 = vmatprep.subr.mxu0 0.0
          %482 = vmatpush1.msra.mxu0 0.0
          %483 = vmatprep.subr.mxu0 0.0
          %484 = vmatpush1.msra.mxu0 0.0
          %485 = vmatprep.subr.mxu0 0.0
          %486 = vmatpush1.msra.mxu0 0.0
          %487 = vmatprep.subr.mxu0 0.0
          %488 = vmatpush1.msra.mxu0 0.0
          %489 = vmatprep.subr.mxu0 0.0
          %490 = vmatpush1.msra.mxu0 0.0
          %491 = vmatprep.subr.mxu0 0.0
          %492 = vmatpush1.msra.mxu0 0.0
          %493 = vmatprep.subr.mxu0 0.0
          %494 = vmatpush1.msra.mxu0 0.0
          %495 = vmatprep.subr.mxu0 0.0
          %496 = vmatpush1.msra.mxu0 0.0
          %497 = vmatprep.subr.mxu0 %v465
          %498 = vmatpush1.msra.mxu0 %v463
          %499 = vmatprep.subr.mxu0 0.0
          %500 = vmatpush2.msra.mxu0 0.0
          %501 = vmatprep.subr.mxu0 0.0
          %502 = vmatpush2.msra.mxu0 0.0
          %503 = vmatprep.subr.mxu0 0.0
          %504 = vmatpush2.msra.mxu0 0.0
          %505 = vmatprep.subr.mxu0 0.0
          %506 = vmatpush2.msra.mxu0 0.0
          %507 = vmatprep.subr.mxu0 0.0
          %508 = vmatpush2.msra.mxu0 0.0
          %509 = vmatprep.subr.mxu0 0.0
          %510 = vmatpush2.msra.mxu0 0.0
          %511 = vmatprep.subr.mxu0 0.0
          %512 = vmatpush2.msra.mxu0 0.0
          %513 = vmatprep.subr.mxu0 0.0
          %514 = vmatpush2.msra.mxu0 0.0
          %515 = vmatprep.subr.mxu0 0.0
          %516 = vmatpush2.msra.mxu0 0.0
          %517 = vmatprep.subr.mxu0 0.0
          %518 = vmatpush2.msra.mxu0 0.0
          %519 = vmatprep.subr.mxu0 0.0
          %520 = vmatpush2.msra.mxu0 0.0
          %521 = vmatprep.subr.mxu0 0.0
          %522 = vmatpush2.msra.mxu0 0.0
          %523 = vmatprep.subr.mxu0 0.0
          %524 = vmatpush2.msra.mxu0 0.0
          %525 = vmatprep.subr.mxu0 0.0
          %526 = vmatpush2.msra.mxu0 0.0
          %527 = vmatprep.subr.mxu0 0.0
          %528 = vmatpush2.msra.mxu0 0.0
          %529 = vmatprep.subr.mxu0 0.0
          %530 = vmatpush2.msra.mxu0 0.0
          %531 = vmatprep.mubr.f32.mxu0 0.0
          %532 = vmatmul.mubr.f32.gmra.mxu0 %v460
          %v533 = vpop.f32.mrf.mxu0
          %v534 = vadd.f32 %v454, %v533
          %v535 = vpop.f32.mrf.mxu0
          %v536 = vadd.f32 %v454, %v535
          %537 = vdwg.mxu0
          %v538 = vld [vmem:[#allocation4] sm:$0xf]
          %v539 = vld [vmem:[%s5] sm:$0xf]
          %541 = vset.pattern.permute.xlu0 0
          %542 = vperm.xlu0 %541, %v539
          %v543 = vpop.permute.xlu0 %542
          %v546 = vcombine.high %v448, %v448
          %v548 = vsel %vm458, %v538, 0
          %v550 = vsel %vm462, %v448, 0
          %v552 = vsel %vm462, %v546, 0
          %554 = vmatprep.subr.mxu0 0.0
          %555 = vmatpush1.msra.mxu0 0.0
          %556 = vmatprep.subr.mxu0 0.0
          %557 = vmatpush1.msra.mxu0 0.0
          %558 = vmatprep.subr.mxu0 0.0
          %559 = vmatpush1.msra.mxu0 0.0
          %560 = vmatprep.subr.mxu0 0.0
          %561 = vmatpush1.msra.mxu0 0.0
          %562 = vmatprep.subr.mxu0 0.0
          %563 = vmatpush1.msra.mxu0 0.0
          %564 = vmatprep.subr.mxu0 0.0
          %565 = vmatpush1.msra.mxu0 0.0
          %566 = vmatprep.subr.mxu0 0.0
          %567 = vmatpush1.msra.mxu0 0.0
          %568 = vmatprep.subr.mxu0 0.0
          %569 = vmatpush1.msra.mxu0 0.0
          %570 = vmatprep.subr.mxu0 0.0
          %571 = vmatpush1.msra.mxu0 0.0
          %572 = vmatprep.subr.mxu0 0.0
          %573 = vmatpush1.msra.mxu0 0.0
          %574 = vmatprep.subr.mxu0 0.0
          %575 = vmatpush1.msra.mxu0 0.0
          %576 = vmatprep.subr.mxu0 0.0
          %577 = vmatpush1.msra.mxu0 0.0
          %578 = vmatprep.subr.mxu0 0.0
          %579 = vmatpush1.msra.mxu0 0.0
          %580 = vmatprep.subr.mxu0 0.0
          %581 = vmatpush1.msra.mxu0 0.0
          %582 = vmatprep.subr.mxu0 0.0
          %583 = vmatpush1.msra.mxu0 0.0
          %584 = vmatprep.subr.mxu0 %v552
          %585 = vmatpush1.msra.mxu0 %v550
          %586 = vmatprep.subr.mxu0 0.0
          %587 = vmatpush2.msra.mxu0 0.0
          %588 = vmatprep.subr.mxu0 0.0
          %589 = vmatpush2.msra.mxu0 0.0
          %590 = vmatprep.subr.mxu0 0.0
          %591 = vmatpush2.msra.mxu0 0.0
          %592 = vmatprep.subr.mxu0 0.0
          %593 = vmatpush2.msra.mxu0 0.0
          %594 = vmatprep.subr.mxu0 0.0
          %595 = vmatpush2.msra.mxu0 0.0
          %596 = vmatprep.subr.mxu0 0.0
          %597 = vmatpush2.msra.mxu0 0.0
          %598 = vmatprep.subr.mxu0 0.0
          %599 = vmatpush2.msra.mxu0 0.0
          %600 = vmatprep.subr.mxu0 0.0
          %601 = vmatpush2.msra.mxu0 0.0
          %602 = vmatprep.subr.mxu0 0.0
          %603 = vmatpush2.msra.mxu0 0.0
          %604 = vmatprep.subr.mxu0 0.0
          %605 = vmatpush2.msra.mxu0 0.0
          %606 = vmatprep.subr.mxu0 0.0
          %607 = vmatpush2.msra.mxu0 0.0
          %608 = vmatprep.subr.mxu0 0.0
          %609 = vmatpush2.msra.mxu0 0.0
          %610 = vmatprep.subr.mxu0 0.0
          %611 = vmatpush2.msra.mxu0 0.0
          %612 = vmatprep.subr.mxu0 0.0
          %613 = vmatpush2.msra.mxu0 0.0
          %614 = vmatprep.subr.mxu0 0.0
          %615 = vmatpush2.msra.mxu0 0.0
          %616 = vmatprep.subr.mxu0 0.0
          %617 = vmatpush2.msra.mxu0 0.0
          %618 = vmatprep.mubr.f32.mxu0 0.0
          %619 = vmatmul.mubr.f32.gmra.mxu0 %v548
          %v620 = vpop.f32.mrf.mxu0
          %v621 = vadd.f32 %v543, %v620
          %v622 = vpop.f32.mrf.mxu0
          %v623 = vadd.f32 %v543, %v622
          %624 = vdwg.mxu0
          %v625 = vpack.c.bf16 %v534, %v534
          %v626 = vpack.c.bf16 %v536, %v536
          %v629 = vcombine.low %v625, %v626
          %v631 = vunpack.c.l.s4 1983009808
          %v632 = vunpack.c.0.s8 %v631
          %v633 = vlaneseq
          %v634 = vshrl.u32 %v633, 7
          %v635 = vsub.s32 %v632, %v634
          %v636 = vrot.slane %v629, %v635
          %638 = vst [vmem:[#allocation2] sm:$0xf] %v636
          %v639 = vpack.c.bf16 %v621, %v621
          %v640 = vpack.c.bf16 %v623, %v623
          %v643 = vcombine.low %v639, %v640
          %v645 = vunpack.c.l.s4 1983009808
          %v646 = vunpack.c.0.s8 %v645
          %v647 = vlaneseq
          %v648 = vshrl.u32 %v647, 7
          %v649 = vsub.s32 %v646, %v648
          %v650 = vrot.slane %v643, %v649
          %652 = vst [vmem:[#allocation3] sm:$0xf] %v650
        $region72: #{tpu_custom_call.1} parent=55 // pred_fallthru
          _
        %v653 = vld [vmem:[%s441] sm:$0xf]
        %v654 = vld [vmem:[%s0] sm:$0xf]
        %v655 = vld [vmem:[%s3] sm:$0xf]
        %657 = vset.pattern.permute.xlu0 0
        %658 = vperm.xlu0 %657, %v655
        %v659 = vpop.permute.xlu0 %658
        %vm661 = vcmask 31744
        %v663 = vsel %vm661, %v654, 0
        %vm665 = vcmask 1043456
        %v667 = vsel %vm665, %v653, 0
        %669 = vmatprep.subr.mxu0 0.0
        %670 = vmatpush1.msra.mxu0 0.0
        %671 = vmatprep.subr.mxu0 0.0
        %672 = vmatpush1.msra.mxu0 0.0
        %673 = vmatprep.subr.mxu0 0.0
        %674 = vmatpush1.msra.mxu0 0.0
        %675 = vmatprep.subr.mxu0 0.0
        %676 = vmatpush1.msra.mxu0 0.0
        %677 = vmatprep.subr.mxu0 0.0
        %678 = vmatpush1.msra.mxu0 0.0
        %679 = vmatprep.subr.mxu0 0.0
        %680 = vmatpush1.msra.mxu0 0.0
        %681 = vmatprep.subr.mxu0 0.0
        %682 = vmatpush1.msra.mxu0 0.0
        %683 = vmatprep.subr.mxu0 0.0
        %684 = vmatpush1.msra.mxu0 0.0
        %685 = vmatprep.subr.mxu0 0.0
        %686 = vmatpush1.msra.mxu0 0.0
        %687 = vmatprep.subr.mxu0 0.0
        %688 = vmatpush1.msra.mxu0 0.0
        %689 = vmatprep.subr.mxu0 0.0
        %690 = vmatpush1.msra.mxu0 0.0
        %691 = vmatprep.subr.mxu0 0.0
        %692 = vmatpush1.msra.mxu0 0.0
        %693 = vmatprep.subr.mxu0 0.0
        %694 = vmatpush1.msra.mxu0 0.0
        %695 = vmatprep.subr.mxu0 0.0
        %696 = vmatpush1.msra.mxu0 0.0
        %697 = vmatprep.subr.mxu0 0.0
        %698 = vmatpush1.msra.mxu0 0.0
        %699 = vmatprep.subr.mxu0 0.0
        %700 = vmatpush1.msra.mxu0 %v667
        %701 = vmatprep.subr.mxu0 0.0
        %702 = vmatpush2.msra.mxu0 0.0
        %703 = vmatprep.subr.mxu0 0.0
        %704 = vmatpush2.msra.mxu0 0.0
        %705 = vmatprep.subr.mxu0 0.0
        %706 = vmatpush2.msra.mxu0 0.0
        %707 = vmatprep.subr.mxu0 0.0
        %708 = vmatpush2.msra.mxu0 0.0
        %709 = vmatprep.subr.mxu0 0.0
        %710 = vmatpush2.msra.mxu0 0.0
        %711 = vmatprep.subr.mxu0 0.0
        %712 = vmatpush2.msra.mxu0 0.0
        %713 = vmatprep.subr.mxu0 0.0
        %714 = vmatpush2.msra.mxu0 0.0
        %715 = vmatprep.subr.mxu0 0.0
        %716 = vmatpush2.msra.mxu0 0.0
        %717 = vmatprep.subr.mxu0 0.0
        %718 = vmatpush2.msra.mxu0 0.0
        %719 = vmatprep.subr.mxu0 0.0
        %720 = vmatpush2.msra.mxu0 0.0
        %721 = vmatprep.subr.mxu0 0.0
        %722 = vmatpush2.msra.mxu0 0.0
        %723 = vmatprep.subr.mxu0 0.0
        %724 = vmatpush2.msra.mxu0 0.0
        %725 = vmatprep.subr.mxu0 0.0
        %726 = vmatpush2.msra.mxu0 0.0
        %727 = vmatprep.subr.mxu0 0.0
        %728 = vmatpush2.msra.mxu0 0.0
        %729 = vmatprep.subr.mxu0 0.0
        %730 = vmatpush2.msra.mxu0 0.0
        %731 = vmatprep.subr.mxu0 0.0
        %732 = vmatpush2.msra.mxu0 0.0
        %733 = vmatprep.mubr.f32.mxu0 0.0
        %734 = vmatmul.mubr.f32.gmra.mxu0 %v663
        %v735 = vpop.f32.mrf.mxu0
        %v736 = vadd.f32 %v659, %v735
        %v737 = vpop.f32.mrf.mxu0
        %738 = vdwg.mxu0
        %v739 = vpack.c.bf16 %v736, %v736
        %v740 = vld [vmem:[#allocation2] sm:$0xf]
        %v743 = vunpack.c.l.s4 1983009808
        %v744 = vunpack.c.0.s8 %v743
        %v745 = vlaneseq
        %v746 = vshrl.u32 %v745, 7
        %v747 = vsub.s32 %v744, %v746
        %v748 = vrot.slane %v740, %v747
        %v749 = vcombine.high %v748, %v748
        %752 = vxpose.xlu0.c.b16.start [1/8] %v748, 128
        %753 = vxpose.xlu0.c.b16.cont [2/8] 0, 128
        %754 = vxpose.xlu0.c.b16.cont [3/8] 0, 128
        %755 = vxpose.xlu0.c.b16.cont [4/8] 0, 128
        %756 = vxpose.xlu0.c.b16.cont [5/8] 0, 128
        %757 = vxpose.xlu0.c.b16.cont [6/8] 0, 128
        %758 = vxpose.xlu0.c.b16.cont [7/8] 0, 128
        %759 = vxpose.xlu0.c.b16.end [8/8] 0, 128
        %v760 = vpop.trf.xlu0
        %v761 = vpop.trf.xlu0
        %v762 = vpop.trf.xlu0
        %v763 = vpop.trf.xlu0
        %v764 = vpop.trf.xlu0
        %v765 = vpop.trf.xlu0
        %v766 = vpop.trf.xlu0
        %v767 = vpop.trf.xlu0
        %768 = vxpose.xlu0.c.b16.start [1/8] %v749, 128
        %769 = vxpose.xlu0.c.b16.cont [2/8] 0, 128
        %770 = vxpose.xlu0.c.b16.cont [3/8] 0, 128
        %771 = vxpose.xlu0.c.b16.cont [4/8] 0, 128
        %772 = vxpose.xlu0.c.b16.cont [5/8] 0, 128
        %773 = vxpose.xlu0.c.b16.cont [6/8] 0, 128
        %774 = vxpose.xlu0.c.b16.cont [7/8] 0, 128
        %775 = vxpose.xlu0.c.b16.end [8/8] 0, 128
        %v776 = vpop.trf.xlu0
        %v777 = vpop.trf.xlu0
        %v778 = vpop.trf.xlu0
        %v779 = vpop.trf.xlu0
        %v780 = vpop.trf.xlu0
        %v781 = vpop.trf.xlu0
        %v782 = vpop.trf.xlu0
        %v783 = vpop.trf.xlu0
        %v785 = vsel %vm661, %v760, 0
        %v788 = vsel %vm661, %v761, 0
        %v791 = vsel %vm661, %v762, 0
        %v794 = vsel %vm661, %v763, 0
        %v797 = vsel %vm661, %v764, 0
        %v800 = vsel %vm661, %v765, 0
        %v803 = vsel %vm661, %v766, 0
        %v806 = vsel %vm661, %v767, 0
        %v809 = vsel %vm661, %v776, 0
        %v812 = vsel %vm661, %v777, 0
        %v815 = vsel %vm661, %v778, 0
        %v818 = vsel %vm661, %v779, 0
        %v821 = vsel %vm661, %v780, 0
        %v824 = vsel %vm661, %v781, 0
        %v827 = vsel %vm661, %v782, 0
        %v830 = vsel %vm661, %v783, 0
        %vm832 = vcmask 1041408
        %v834 = vsel %vm832, %v739, 0
        %836 = vmatprep.subr.bf16.mxu0 0
        %837 = vmatpush1.bf16.msra.mxu0 0
        %838 = vmatprep.subr.bf16.mxu0 0
        %839 = vmatpush1.bf16.msra.mxu0 0
        %840 = vmatprep.subr.bf16.mxu0 0
        %841 = vmatpush1.bf16.msra.mxu0 0
        %842 = vmatprep.subr.bf16.mxu0 0
        %843 = vmatpush1.bf16.msra.mxu0 0
        %844 = vmatprep.subr.bf16.mxu0 0
        %845 = vmatpush1.bf16.msra.mxu0 0
        %846 = vmatprep.subr.bf16.mxu0 0
        %847 = vmatpush1.bf16.msra.mxu0 0
        %848 = vmatprep.subr.bf16.mxu0 0
        %849 = vmatpush1.bf16.msra.mxu0 0
        %850 = vmatprep.subr.bf16.mxu0 0
        %851 = vmatpush1.bf16.msra.mxu0 %v834
        %852 = vmatprep.subr.bf16.mxu0 0
        %853 = vmatpush2.bf16.msra.mxu0 0
        %854 = vmatprep.subr.bf16.mxu0 0
        %855 = vmatpush2.bf16.msra.mxu0 0
        %856 = vmatprep.subr.bf16.mxu0 0
        %857 = vmatpush2.bf16.msra.mxu0 0
        %858 = vmatprep.subr.bf16.mxu0 0
        %859 = vmatpush2.bf16.msra.mxu0 0
        %860 = vmatprep.subr.bf16.mxu0 0
        %861 = vmatpush2.bf16.msra.mxu0 0
        %862 = vmatprep.subr.bf16.mxu0 0
        %863 = vmatpush2.bf16.msra.mxu0 0
        %864 = vmatprep.subr.bf16.mxu0 0
        %865 = vmatpush2.bf16.msra.mxu0 0
        %866 = vmatprep.subr.bf16.mxu0 0
        %867 = vmatpush2.bf16.msra.mxu0 0
        %868 = vmatprep.mubr.bf16.mxu0 0
        %869 = vmatmul.mubr.bf16.gmra.mxu0 %v785
        %v870 = vpop.f32.mrf.mxu0
        %v871 = vadd.f32 0.0, %v870
        %v872 = vpop.f32.mrf.mxu0
        %v873 = vpop.f32.mrf.mxu0
        %v874 = vadd.f32 0.0, %v873
        %v875 = vpop.f32.mrf.mxu0
        %876 = vmatprep.mubr.bf16.mxu0 0
        %877 = vmatmul.mubr.bf16.gmra.mxu0 %v788
        %v878 = vpop.f32.mrf.mxu0
        %v879 = vadd.f32 0.0, %v878
        %v880 = vpop.f32.mrf.mxu0
        %v881 = vpop.f32.mrf.mxu0
        %v882 = vadd.f32 0.0, %v881
        %v883 = vpop.f32.mrf.mxu0
        %884 = vmatprep.mubr.bf16.mxu0 0
        %885 = vmatmul.mubr.bf16.gmra.mxu0 %v791
        %v886 = vpop.f32.mrf.mxu0
        %v887 = vadd.f32 0.0, %v886
        %v888 = vpop.f32.mrf.mxu0
        %v889 = vpop.f32.mrf.mxu0
        %v890 = vadd.f32 0.0, %v889
        %v891 = vpop.f32.mrf.mxu0
        %892 = vmatprep.mubr.bf16.mxu0 0
        %893 = vmatmul.mubr.bf16.gmra.mxu0 %v794
        %v894 = vpop.f32.mrf.mxu0
        %v895 = vadd.f32 0.0, %v894
        %v896 = vpop.f32.mrf.mxu0
        %v897 = vpop.f32.mrf.mxu0
        %v898 = vadd.f32 0.0, %v897
        %v899 = vpop.f32.mrf.mxu0
        %900 = vmatprep.mubr.bf16.mxu0 0
        %901 = vmatmul.mubr.bf16.gmra.mxu0 %v797
        %v902 = vpop.f32.mrf.mxu0
        %v903 = vadd.f32 0.0, %v902
        %v904 = vpop.f32.mrf.mxu0
        %v905 = vpop.f32.mrf.mxu0
        %v906 = vadd.f32 0.0, %v905
        %v907 = vpop.f32.mrf.mxu0
        %908 = vmatprep.mubr.bf16.mxu0 0
        %909 = vmatmul.mubr.bf16.gmra.mxu0 %v800
        %v910 = vpop.f32.mrf.mxu0
        %v911 = vadd.f32 0.0, %v910
        %v912 = vpop.f32.mrf.mxu0
        %v913 = vpop.f32.mrf.mxu0
        %v914 = vadd.f32 0.0, %v913
        %v915 = vpop.f32.mrf.mxu0
        %916 = vmatprep.mubr.bf16.mxu0 0
        %917 = vmatmul.mubr.bf16.gmra.mxu0 %v803
        %v918 = vpop.f32.mrf.mxu0
        %v919 = vadd.f32 0.0, %v918
        %v920 = vpop.f32.mrf.mxu0
        %v921 = vpop.f32.mrf.mxu0
        %v922 = vadd.f32 0.0, %v921
        %v923 = vpop.f32.mrf.mxu0
        %924 = vmatprep.mubr.bf16.mxu0 0
        %925 = vmatmul.mubr.bf16.gmra.mxu0 %v806
        %v926 = vpop.f32.mrf.mxu0
        %v927 = vadd.f32 0.0, %v926
        %v928 = vpop.f32.mrf.mxu0
        %v929 = vpop.f32.mrf.mxu0
        %v930 = vadd.f32 0.0, %v929
        %v931 = vpop.f32.mrf.mxu0
        %932 = vmatprep.mubr.bf16.mxu0 0
        %933 = vmatmul.mubr.bf16.gmra.mxu0 %v809
        %v934 = vpop.f32.mrf.mxu0
        %v935 = vadd.f32 0.0, %v934
        %v936 = vpop.f32.mrf.mxu0
        %v937 = vpop.f32.mrf.mxu0
        %v938 = vadd.f32 0.0, %v937
        %v939 = vpop.f32.mrf.mxu0
        %940 = vmatprep.mubr.bf16.mxu0 0
        %941 = vmatmul.mubr.bf16.gmra.mxu0 %v812
        %v942 = vpop.f32.mrf.mxu0
        %v943 = vadd.f32 0.0, %v942
        %v944 = vpop.f32.mrf.mxu0
        %v945 = vpop.f32.mrf.mxu0
        %v946 = vadd.f32 0.0, %v945
        %v947 = vpop.f32.mrf.mxu0
        %948 = vmatprep.mubr.bf16.mxu0 0
        %949 = vmatmul.mubr.bf16.gmra.mxu0 %v815
        %v950 = vpop.f32.mrf.mxu0
        %v951 = vadd.f32 0.0, %v950
        %v952 = vpop.f32.mrf.mxu0
        %v953 = vpop.f32.mrf.mxu0
        %v954 = vadd.f32 0.0, %v953
        %v955 = vpop.f32.mrf.mxu0
        %956 = vmatprep.mubr.bf16.mxu0 0
        %957 = vmatmul.mubr.bf16.gmra.mxu0 %v818
        %v958 = vpop.f32.mrf.mxu0
        %v959 = vadd.f32 0.0, %v958
        %v960 = vpop.f32.mrf.mxu0
        %v961 = vpop.f32.mrf.mxu0
        %v962 = vadd.f32 0.0, %v961
        %v963 = vpop.f32.mrf.mxu0
        %964 = vmatprep.mubr.bf16.mxu0 0
        %965 = vmatmul.mubr.bf16.gmra.mxu0 %v821
        %v966 = vpop.f32.mrf.mxu0
        %v967 = vadd.f32 0.0, %v966
        %v968 = vpop.f32.mrf.mxu0
        %v969 = vpop.f32.mrf.mxu0
        %v970 = vadd.f32 0.0, %v969
        %v971 = vpop.f32.mrf.mxu0
        %972 = vmatprep.mubr.bf16.mxu0 0
        %973 = vmatmul.mubr.bf16.gmra.mxu0 %v824
        %v974 = vpop.f32.mrf.mxu0
        %v975 = vadd.f32 0.0, %v974
        %v976 = vpop.f32.mrf.mxu0
        %v977 = vpop.f32.mrf.mxu0
        %v978 = vadd.f32 0.0, %v977
        %v979 = vpop.f32.mrf.mxu0
        %980 = vmatprep.mubr.bf16.mxu0 0
        %981 = vmatmul.mubr.bf16.gmra.mxu0 %v827
        %v982 = vpop.f32.mrf.mxu0
        %v983 = vadd.f32 0.0, %v982
        %v984 = vpop.f32.mrf.mxu0
        %v985 = vpop.f32.mrf.mxu0
        %v986 = vadd.f32 0.0, %v985
        %v987 = vpop.f32.mrf.mxu0
        %988 = vmatprep.mubr.bf16.mxu0 0
        %989 = vmatmul.mubr.bf16.gmra.mxu0 %v830
        %v990 = vpop.f32.mrf.mxu0
        %v991 = vadd.f32 0.0, %v990
        %v992 = vpop.f32.mrf.mxu0
        %v993 = vpop.f32.mrf.mxu0
        %v994 = vadd.f32 0.0, %v993
        %v995 = vpop.f32.mrf.mxu0
        %996 = vdwg.mxu0
        %v997 = vmax.f32 %v871, %v887
        %v998 = vmax.f32 %v874, %v890
        %v999 = vmax.f32 %v879, %v895
        %v1000 = vmax.f32 %v882, %v898
        %v1001 = vmax.f32 %v997, %v903
        %v1002 = vmax.f32 %v998, %v906
        %v1003 = vmax.f32 %v999, %v911
        %v1004 = vmax.f32 %v1000, %v914
        %v1005 = vmax.f32 %v1001, %v919
        %v1006 = vmax.f32 %v1002, %v922
        %v1007 = vmax.f32 %v1003, %v927
        %v1008 = vmax.f32 %v1004, %v930
        %v1009 = vmax.f32 %v1005, %v935
        %v1010 = vmax.f32 %v1006, %v938
        %v1011 = vmax.f32 %v1007, %v943
        %v1012 = vmax.f32 %v1008, %v946
        %v1013 = vmax.f32 %v1009, %v951
        %v1014 = vmax.f32 %v1010, %v954
        %v1015 = vmax.f32 %v1011, %v959
        %v1016 = vmax.f32 %v1012, %v962
        %v1017 = vmax.f32 %v1013, %v967
        %v1018 = vmax.f32 %v1014, %v970
        %v1019 = vmax.f32 %v1015, %v975
        %v1020 = vmax.f32 %v1016, %v978
        %v1021 = vmax.f32 %v1017, %v983
        %v1022 = vmax.f32 %v1018, %v986
        %v1023 = vmax.f32 %v1019, %v991
        %v1024 = vmax.f32 %v1020, %v994
        %v1025 = vmax.f32 %v1021, %v1022
        %v1026 = vmax.f32 %v1023, %v1024
        %v1027 = vmax.f32 %v1025, %v1026
        %v1028 = vrot.slane %v1027, 4
        %v1029 = vmax.f32 %v1027, %v1028
        %v1030 = vrot.slane %v1029, 2
        %v1031 = vmax.f32 %v1029, %v1030
        %v1032 = vrot.slane %v1031, 1
        %v1033 = vmax.f32 %v1031, %v1032
        %v1034 = vsub.f32 %v871, %v1033
        %v1035 = vsub.f32 %v874, %v1033
        %v1036 = vsub.f32 %v879, %v1033
        %v1037 = vsub.f32 %v882, %v1033
        %v1038 = vsub.f32 %v887, %v1033
        %v1039 = vsub.f32 %v890, %v1033
        %v1040 = vsub.f32 %v895, %v1033
        %v1041 = vsub.f32 %v898, %v1033
        %v1042 = vsub.f32 %v903, %v1033
        %v1043 = vsub.f32 %v906, %v1033
        %v1044 = vsub.f32 %v911, %v1033
        %v1045 = vsub.f32 %v914, %v1033
        %v1046 = vsub.f32 %v919, %v1033
        %v1047 = vsub.f32 %v922, %v1033
        %v1048 = vsub.f32 %v927, %v1033
        %v1049 = vsub.f32 %v930, %v1033
        %v1050 = vsub.f32 %v935, %v1033
        %v1051 = vsub.f32 %v938, %v1033
        %v1052 = vsub.f32 %v943, %v1033
        %v1053 = vsub.f32 %v946, %v1033
        %v1054 = vsub.f32 %v951, %v1033
        %v1055 = vsub.f32 %v954, %v1033
        %v1056 = vsub.f32 %v959, %v1033
        %v1057 = vsub.f32 %v962, %v1033
        %v1058 = vsub.f32 %v967, %v1033
        %v1059 = vsub.f32 %v970, %v1033
        %v1060 = vsub.f32 %v975, %v1033
        %v1061 = vsub.f32 %v978, %v1033
        %v1062 = vsub.f32 %v983, %v1033
        %v1063 = vsub.f32 %v986, %v1033
        %v1064 = vsub.f32 %v991, %v1033
        %v1065 = vsub.f32 %v994, %v1033
        %v1066 = vmul.f32 %v1034, 1.442695
        %v1067 = vpow.pop %v1066
        %v1068 = vmul.f32 %v1035, 1.442695
        %v1069 = vpow.pop %v1068
        %v1070 = vmul.f32 %v1036, 1.442695
        %v1071 = vpow.pop %v1070
        %v1072 = vmul.f32 %v1037, 1.442695
        %v1073 = vpow.pop %v1072
        %v1074 = vmul.f32 %v1038, 1.442695
        %v1075 = vpow.pop %v1074
        %v1076 = vmul.f32 %v1039, 1.442695
        %v1077 = vpow.pop %v1076
        %v1078 = vmul.f32 %v1040, 1.442695
        %v1079 = vpow.pop %v1078
        %v1080 = vmul.f32 %v1041, 1.442695
        %v1081 = vpow.pop %v1080
        %v1082 = vmul.f32 %v1042, 1.442695
        %v1083 = vpow.pop %v1082
        %v1084 = vmul.f32 %v1043, 1.442695
        %v1085 = vpow.pop %v1084
        %v1086 = vmul.f32 %v1044, 1.442695
        %v1087 = vpow.pop %v1086
        %v1088 = vmul.f32 %v1045, 1.442695
        %v1089 = vpow.pop %v1088
        %v1090 = vmul.f32 %v1046, 1.442695
        %v1091 = vpow.pop %v1090
        %v1092 = vmul.f32 %v1047, 1.442695
        %v1093 = vpow.pop %v1092
        %v1094 = vmul.f32 %v1048, 1.442695
        %v1095 = vpow.pop %v1094
        %v1096 = vmul.f32 %v1049, 1.442695
        %v1097 = vpow.pop %v1096
        %v1098 = vmul.f32 %v1050, 1.442695
        %v1099 = vpow.pop %v1098
        %v1100 = vmul.f32 %v1051, 1.442695
        %v1101 = vpow.pop %v1100
        %v1102 = vmul.f32 %v1052, 1.442695
        %v1103 = vpow.pop %v1102
        %v1104 = vmul.f32 %v1053, 1.442695
        %v1105 = vpow.pop %v1104
        %v1106 = vmul.f32 %v1054, 1.442695
        %v1107 = vpow.pop %v1106
        %v1108 = vmul.f32 %v1055, 1.442695
        %v1109 = vpow.pop %v1108
        %v1110 = vmul.f32 %v1056, 1.442695
        %v1111 = vpow.pop %v1110
        %v1112 = vmul.f32 %v1057, 1.442695
        %v1113 = vpow.pop %v1112
        %v1114 = vmul.f32 %v1058, 1.442695
        %v1115 = vpow.pop %v1114
        %v1116 = vmul.f32 %v1059, 1.442695
        %v1117 = vpow.pop %v1116
        %v1118 = vmul.f32 %v1060, 1.442695
        %v1119 = vpow.pop %v1118
        %v1120 = vmul.f32 %v1061, 1.442695
        %v1121 = vpow.pop %v1120
        %v1122 = vmul.f32 %v1062, 1.442695
        %v1123 = vpow.pop %v1122
        %v1124 = vmul.f32 %v1063, 1.442695
        %v1125 = vpow.pop %v1124
        %v1126 = vmul.f32 %v1064, 1.442695
        %v1127 = vpow.pop %v1126
        %v1128 = vmul.f32 %v1065, 1.442695
        %v1129 = vpow.pop %v1128
        %v1130 = vadd.f32 %v1067, %v1069
        %v1131 = vadd.f32 %v1130, %v1071
        %v1132 = vadd.f32 %v1131, %v1073
        %v1133 = vadd.f32 %v1132, %v1075
        %v1134 = vadd.f32 %v1133, %v1077
        %v1135 = vadd.f32 %v1134, %v1079
        %v1136 = vadd.f32 %v1135, %v1081
        %v1137 = vadd.f32 %v1136, %v1083
        %v1138 = vadd.f32 %v1137, %v1085
        %v1139 = vadd.f32 %v1138, %v1087
        %v1140 = vadd.f32 %v1139, %v1089
        %v1141 = vadd.f32 %v1140, %v1091
        %v1142 = vadd.f32 %v1141, %v1093
        %v1143 = vadd.f32 %v1142, %v1095
        %v1144 = vadd.f32 %v1143, %v1097
        %v1145 = vadd.f32 %v1144, %v1099
        %v1146 = vadd.f32 %v1145, %v1101
        %v1147 = vadd.f32 %v1146, %v1103
        %v1148 = vadd.f32 %v1147, %v1105
        %v1149 = vadd.f32 %v1148, %v1107
        %v1150 = vadd.f32 %v1149, %v1109
        %v1151 = vadd.f32 %v1150, %v1111
        %v1152 = vadd.f32 %v1151, %v1113
        %v1153 = vadd.f32 %v1152, %v1115
        %v1154 = vadd.f32 %v1153, %v1117
        %v1155 = vadd.f32 %v1154, %v1119
        %v1156 = vadd.f32 %v1155, %v1121
        %v1157 = vadd.f32 %v1156, %v1123
        %v1158 = vadd.f32 %v1157, %v1125
        %v1159 = vadd.f32 %v1158, %v1127
        %v1160 = vadd.f32 %v1159, %v1129
        %v1161 = vrot.slane %v1160, 4
        %v1162 = vadd.f32 %v1160, %v1161
        %v1163 = vrot.slane %v1162, 2
        %v1164 = vadd.f32 %v1162, %v1163
        %v1165 = vrot.slane %v1164, 1
        %v1166 = vadd.f32 %v1164, %v1165
        %v1167 = vld [vmem:[#allocation3] sm:$0xf]
        %v1168 = vpack.c.bf16 %v1069, %v1067
        %v1169 = vpack.c.bf16 %v1073, %v1071
        %v1170 = vpack.c.bf16 %v1077, %v1075
        %v1171 = vpack.c.bf16 %v1081, %v1079
        %v1172 = vpack.c.bf16 %v1085, %v1083
        %v1173 = vpack.c.bf16 %v1089, %v1087
        %v1174 = vpack.c.bf16 %v1093, %v1091
        %v1175 = vpack.c.bf16 %v1097, %v1095
        %v1176 = vpack.c.bf16 %v1101, %v1099
        %v1177 = vpack.c.bf16 %v1105, %v1103
        %v1178 = vpack.c.bf16 %v1109, %v1107
        %v1179 = vpack.c.bf16 %v1113, %v1111
        %v1180 = vpack.c.bf16 %v1117, %v1115
        %v1181 = vpack.c.bf16 %v1121, %v1119
        %v1182 = vpack.c.bf16 %v1125, %v1123
        %v1183 = vpack.c.bf16 %v1129, %v1127
        %v1186 = vunpack.c.l.s4 1983009808
        %v1187 = vunpack.c.0.s8 %v1186
        %v1188 = vlaneseq
        %v1189 = vshrl.u32 %v1188, 7
        %v1190 = vsub.s32 %v1187, %v1189
        %v1191 = vrot.slane %v1167, %v1190
        %v1192 = vcombine.high %v1191, %v1191
        %1195 = vmatprep.subr.bf16.mxu0 0
        %1196 = vmatpush1.bf16.msra.mxu0 %v1175
        %1197 = vmatprep.subr.bf16.mxu0 0
        %1198 = vmatpush1.bf16.msra.mxu0 %v1174
        %1199 = vmatprep.subr.bf16.mxu0 0
        %1200 = vmatpush1.bf16.msra.mxu0 %v1173
        %1201 = vmatprep.subr.bf16.mxu0 0
        %1202 = vmatpush1.bf16.msra.mxu0 %v1172
        %1203 = vmatprep.subr.bf16.mxu0 0
        %1204 = vmatpush1.bf16.msra.mxu0 %v1171
        %1205 = vmatprep.subr.bf16.mxu0 0
        %1206 = vmatpush1.bf16.msra.mxu0 %v1170
        %1207 = vmatprep.subr.bf16.mxu0 0
        %1208 = vmatpush1.bf16.msra.mxu0 %v1169
        %1209 = vmatprep.subr.bf16.mxu0 0
        %1210 = vmatpush1.bf16.msra.mxu0 %v1168
        %1211 = vmatprep.subr.bf16.mxu0 0
        %1212 = vmatpush2.bf16.msra.mxu0 %v1183
        %1213 = vmatprep.subr.bf16.mxu0 0
        %1214 = vmatpush2.bf16.msra.mxu0 %v1182
        %1215 = vmatprep.subr.bf16.mxu0 0
        %1216 = vmatpush2.bf16.msra.mxu0 %v1181
        %1217 = vmatprep.subr.bf16.mxu0 0
        %1218 = vmatpush2.bf16.msra.mxu0 %v1180
        %1219 = vmatprep.subr.bf16.mxu0 0
        %1220 = vmatpush2.bf16.msra.mxu0 %v1179
        %1221 = vmatprep.subr.bf16.mxu0 0
        %1222 = vmatpush2.bf16.msra.mxu0 %v1178
        %1223 = vmatprep.subr.bf16.mxu0 0
        %1224 = vmatpush2.bf16.msra.mxu0 %v1177
        %1225 = vmatprep.subr.bf16.mxu0 0
        %1226 = vmatpush2.bf16.msra.mxu0 %v1176
        %1227 = vmatprep.mubr.bf16.mxu0 %v1192
        %1228 = vmatmul.mubr.bf16.gmra.mxu0 %v1191
        %v1229 = vpop.f32.mrf.mxu0
        %v1230 = vadd.f32 0.0, %v1229
        %v1231 = vpop.f32.mrf.mxu0
        %v1232 = vpop.f32.mrf.mxu0
        %v1233 = vpop.f32.mrf.mxu0
        %1234 = vdwg.mxu0
        %v1235 = vrcp.pop %v1166
        %v1236 = vmul.f32 %v1230, %v1235
        %v1237 = vadd.f32 %v653, %v1236
        %1238 = vst [vmem:[%s433] sm:$0xf] %v1237
        %s1239 = sand.u32 %s255, 1
        %s1240 = scalar_lea.sflag [#allocation6], %s1239
        %s1241 = sand.u32 %s255, 1
        %s1242 = smul.addr %s1241, 4
        %s1243 = scalar_lea.vmem [#allocation10], %s1242
        // Predicated region
        $region73: #{tpu_custom_call.1} parent=55 // pred_check
          %p1244 = pneg %p265
        $region74: #{tpu_custom_call.1} parent=55 // pred_check_branch
          %1246 = sbr.rel (%p1244) target = $region76
        $region75: #{tpu_custom_call.1} parent=55 // pred_region
          %s1248 = ssub.s32 64, 64
          %1249 = vsyncadd %s1240, %s1248
          %s1250 = smul.addr %s31, 2
          %s1251 = sadd.s32 %s32, %s1250
          %s1252 = smul.addr %s1251, 64
          %s1253 = scalar_lea.hbm %s9, %s1252
          %s1255 = sshll.u32 %s1243, 4
          %s1256 = int_to_ptr.vmem [resolvable:$true] %s1255
          %1258 = dma.vmem_to_hbm [thread:$0]  %s1256, 64, %s1253, %s1240
        $region76: #{tpu_custom_call.1} parent=55 // pred_fallthru
          _
      $region56: #{tpu_custom_call.1} parent=5 // pred_fallthru
        _
      %p1259 = scmp.le.s32.totalorder 2, %s22
      // Predicated region
      $region77: #{tpu_custom_call.1} parent=5 // pred_check
        %p1260 = pneg %p1259
      $region78: #{tpu_custom_call.1} parent=5 // pred_check_branch
        %1262 = sbr.rel (%p1260) target = $region80
      $region79: #{tpu_custom_call.1} parent=5 // pred_region
        %s1263 = ssub.s32 %s22, 2
        // Predicated region
        $region81: #{tpu_custom_call.1} parent=79 // pred_check
          %p1264 = pneg %p271
        $region82: #{tpu_custom_call.1} parent=79 // pred_check_branch
          %1266 = sbr.rel (%p1264) target = $region84
        $region83: #{tpu_custom_call.1} parent=79 // pred_region
          %s1267 = sand.u32 %s256, 1
          %s1268 = scalar_lea.sflag [#allocation6], %s1267
          %s1269 = sand.u32 %s256, 1
          %s1270 = smul.addr %s1269, 4
          %s1271 = scalar_lea.vmem [#allocation10], %s1270
          %1272 = dma.done %s1268, 64
        $region84: #{tpu_custom_call.1} parent=79 // pred_fallthru
          _
      $region80: #{tpu_custom_call.1} parent=5 // pred_fallthru
        _
    $region6: #{tpu_custom_call.1} parent=1 // loop_footer
      %s26 = sadd.s32 1, %s22
    $region7: #{tpu_custom_call.1} parent=1 // loop_footer_branch
      %21 = sbr.rel target = $region3
    $region8: #{tpu_custom_call.1} parent=1 // loop_exit
      _
    %1273 = vsyncpa [#allocation5], 1
    %s1274 = scalar_lea.sflag [#allocation5], 1
    %1275 = vsyncpa %s1274, 1
    %1276 = vsyncpa [#allocation8], 1
    %s1277 = scalar_lea.sflag [#allocation8], 1
    %1278 = vsyncpa %s1277, 1
    %1279 = vsyncpa [#allocation6], 1
    %s1280 = scalar_lea.sflag [#allocation6], 1
    %1281 = vsyncpa %s1280, 1

</llo_original>
